<compile_context>
chip_gen: v6e
topology: v6e:2x2x1
jax: 0.10.0
libtpu: 0.0.40
codegen_flags: <defaults>
</compile_context>

<pallas_src>
import jax
import jax.numpy as jnp
from jax.experimental import pallas as pl
from jax.experimental.pallas import tpu as pltpu


def conv2d_im2col_kernel(w_ref, p_ref, b_ref, o_ref):
    """Single-invocation conv-as-matmul.

    w_ref: (OC, C*KH*KW)       f32 VMEM  -- OIHW weights, (C,KH,KW) flattened
    p_ref: (C*KH*KW, N*OH*OW)  f32 VMEM  -- im2col patch matrix
    b_ref: (OC, 1)             f32 VMEM  -- bias (broadcast over pixels)
    o_ref: (OC, N*OH*OW)       f32 VMEM  -- lane-dense output slab
    """
    acc = jnp.dot(w_ref[...], p_ref[...], preferred_element_type=jnp.float32)
    o_ref[...] = (acc + b_ref[...]).astype(o_ref.dtype)


def conv2d(x, w, b):
    """Stride-1, padding-0 ("valid") 2D conv.

    x: (N, C, H, W), w: (OC, C, KH, KW), b: (OC,)  ->  (N, OC, OH, OW)
    """
    N, C, H, W = x.shape
    OC, C_w, KH, KW = w.shape
    assert C_w == C
    OH, OW = H - KH + 1, W - KW + 1
    CKK = C * KH * KW
    P = N * OH * OW

    # im2col in the wrapper (layout plumbing handled by XLA). Tap order matches
    # the row-major flattening of the (C, KH, KW) weight axes below.
    cols = []
    for c in range(C):
        for kh in range(KH):
            for kw in range(KW):
                cols.append(x[:, c, kh:kh + OH, kw:kw + OW].reshape(P))
    patches = jnp.stack(cols, axis=0)              # (CKK, P)

    w2d = w.reshape(OC, CKK).astype(jnp.float32)   # (OC, CKK)
    b2d = b.reshape(OC, 1).astype(jnp.float32)     # (OC, 1)

    # Single kernel invocation, no grid: all operands are full-array VMEM
    # blocks. (If shapes grow, tile P with a "parallel" grid axis and re-check
    # the 2x double-buffered block budget against the scoped VMEM limit.)
    out2d = pl.pallas_call(
        conv2d_im2col_kernel,
        out_shape=jax.ShapeDtypeStruct((OC, P), x.dtype),
        in_specs=[
            pl.BlockSpec(memory_space=pltpu.MemorySpace.VMEM),  # weights (OC, CKK)
            pl.BlockSpec(memory_space=pltpu.MemorySpace.VMEM),  # patches (CKK, P)
            pl.BlockSpec(memory_space=pltpu.MemorySpace.VMEM),  # bias    (OC, 1)
        ],
        out_specs=pl.BlockSpec(memory_space=pltpu.MemorySpace.VMEM),
    )(w2d, patches, b2d)

    # Restore PyTorch NCHW layout: (OC, N*OH*OW) -> (N, OC, OH, OW).
    return out2d.reshape(OC, N, OH, OW).transpose(1, 0, 2, 3)


if __name__ == "__main__":
    # Shapes implied by the module: Conv2d(in=3, out=6, k=3, stride=1, pad=0).
    N, C, H, W = 2, 3, 16, 16
    OC, KH, KW = 6, 3, 3

    key = jax.random.PRNGKey(0)
    kx, kw_key, kb_key = jax.random.split(key, 3)

    x = jax.random.normal(kx, (N, C, H, W), dtype=jnp.float32)

    # Deterministic init mimicking PyTorch Conv2d default (uniform +-1/sqrt(fan_in)).
    fan_in = C * KH * KW
    bound = 1.0 / (fan_in ** 0.5)
    w = jax.random.uniform(kw_key, (OC, C, KH, KW), jnp.float32, -bound, bound)
    b = jax.random.uniform(kb_key, (OC,), jnp.float32, -bound, bound)

    out = jax.jit(conv2d)(x, w, b)
    out = jax.block_until_ready(out)

    # Cross-check against XLA's convolution (reference semantics of nn.Conv2d).
    ref = jax.lax.conv_general_dilated(
        x, w, window_strides=(1, 1), padding="VALID",
        dimension_numbers=("NCHW", "OIHW", "NCHW"),
    ) + b[None, :, None, None]

    assert out.shape == (N, OC, H - KH + 1, W - KW + 1), out.shape
    # Slightly relaxed vs. exact f32: MXU accumulation order differs from lax.conv.
    assert jnp.allclose(out, ref, atol=1e-4, rtol=1e-4), "mismatch vs reference conv"

    print("KERNEL_OK")
</pallas_src>

<mosaic_0001>
module attributes {stable_mosaic.version = 11 : i64} {
  func.func @conv2d_im2col_kernel(%arg0: memref<6x27xf32, #tpu.memory_space<vmem>>, %arg1: memref<27x392xf32, #tpu.memory_space<vmem>>, %arg2: memref<6x1xf32, #tpu.memory_space<vmem>>, %arg3: memref<6x392xf32, #tpu.memory_space<vmem>>) attributes {dimension_semantics = [], scalar_prefetch = 0 : i64, scratch_operands = 0 : i64, tpu.core_type = #tpu.core_type<tc>} {
    %c0 = arith.constant 0 : index
    %c0_0 = arith.constant 0 : index
    %0 = vector.load %arg0[%c0, %c0_0] : memref<6x27xf32, #tpu.memory_space<vmem>>, vector<6x27xf32>
    %c0_1 = arith.constant 0 : index
    %c0_2 = arith.constant 0 : index
    %1 = vector.load %arg1[%c0_1, %c0_2] : memref<27x392xf32, #tpu.memory_space<vmem>>, vector<27x392xf32>
    %cst = arith.constant dense<0.000000e+00> : vector<6x392xf32>
    %2 = tpu.matmul %0, %1, %cst {dimension_numbers = #tpu.dot_dimension_numbers<[1], [0], [0], [1], [0, 0, 1, 1], [], []>} : vector<6x27xf32>, vector<27x392xf32>, vector<6x392xf32> -> vector<6x392xf32>
    %c0_3 = arith.constant 0 : index
    %c0_4 = arith.constant 0 : index
    %3 = vector.load %arg2[%c0_3, %c0_4] : memref<6x1xf32, #tpu.memory_space<vmem>>, vector<6x1xf32>
    %4 = vector.broadcast %3 : vector<6x1xf32> to vector<6x392xf32>
    %5 = arith.addf %2, %4 : vector<6x392xf32>
    %c0_5 = arith.constant 0 : index
    %c0_6 = arith.constant 0 : index
    %6 = vector.load %arg3[%c0_5, %c0_6] : memref<6x392xf32, #tpu.memory_space<vmem>>, vector<6x392xf32>
    tpu.vector_store %arg3[%c0_5, %c0_6], %5 {strides = array<i32>} : memref<6x392xf32, #tpu.memory_space<vmem>>, vector<6x392xf32>,
    return
  }
}

</mosaic_0001>

<llo_original>
// kernel: squeeze.35
$region0: #{squeeze.35}
  %s0 = inlined_call_operand.vmem [shape: f32[2,1,14,14], index: 0, kind: input, shape index: {}]
  %s1 = inlined_call_operand.vmem [shape: f32[1,392], index: 1, kind: output, shape index: {}]
  $region1: #{squeeze.35} parent=0
    #allocation0 [shape = 'u8[16384]{0}', space=vmem, size = 0x4000, scoped, tag = 'scoped mem for output reshape']
    %v2 = vld [vmem:[%s0] sm:$0x1]
    %vm3 = vcmask 113664
    %4 = vst.msk [vmem:[#allocation0] sm:$0x1] %vm3, %v2
    %s5 = scalar_lea.vmem %s0, 9
    %v6 = vld [vmem:[%s5] sm:$0x1]
    %s7 = scalar_lea.vmem %s0, 9
    %v8 = vld [vmem:[%s7] sm:$0x1]
    %vm9 = vcmask 15360
    %v10 = vsel %vm9, %v8, %v6
    %11 = vrot.lane.b32.xlu0 %v10, 126
    %v12 = vpop.permute.xlu0 %11
    %vm13 = vcmask 97280
    %s14 = scalar_lea.vmem [#allocation0], 8
    %15 = vst.msk [vmem:[%s14] sm:$0x1] %vm13, %v12
    %vm16 = vcmask 1048560
    %17 = vst.msk [vmem:[#allocation0] sm:$0x1] %vm16, %v12
    %s18 = scalar_lea.vmem %s0, 20
    %v19 = vld [vmem:[%s18] sm:$0x1]
    %s20 = scalar_lea.vmem %s0, 20
    %v21 = vld [vmem:[%s20] sm:$0x1]
    %vm22 = vcmask 31744
    %v23 = vsel %vm22, %v21, %v19
    %24 = vrot.lane.b32.xlu0 %v23, 124
    %v25 = vpop.permute.xlu0 %24
    %vm26 = vcmask 80896
    %s27 = scalar_lea.vmem [#allocation0], 16
    %28 = vst.msk [vmem:[%s27] sm:$0x1] %vm26, %v25
    %vm29 = vcmask 1048544
    %s30 = scalar_lea.vmem [#allocation0], 8
    %31 = vst.msk [vmem:[%s30] sm:$0x1] %vm29, %v25
    %s32 = scalar_lea.vmem %s0, 29
    %v33 = vld [vmem:[%s32] sm:$0x1]
    %s34 = scalar_lea.vmem %s0, 29
    %v35 = vld [vmem:[%s34] sm:$0x1]
    %vm36 = vcmask 48128
    %v37 = vsel %vm36, %v35, %v33
    %38 = vrot.lane.b32.xlu0 %v37, 122
    %v39 = vpop.permute.xlu0 %38
    %vm40 = vcmask 64512
    %s41 = scalar_lea.vmem [#allocation0], 24
    %42 = vst.msk [vmem:[%s41] sm:$0x1] %vm40, %v39
    %vm43 = vcmask 1048528
    %s44 = scalar_lea.vmem [#allocation0], 16
    %45 = vst.msk [vmem:[%s44] sm:$0x1] %vm43, %v39
    %s46 = scalar_lea.vmem %s0, 8
    %v47 = vld [vmem:[%s46] sm:$0x1]
    %48 = vrot.lane.b32.xlu0 %v47, 112
    %v49 = vpop.permute.xlu0 %48
    %vm50 = vcmask 1032064
    %51 = vst.msk [vmem:[#allocation0] sm:$0x1] %vm50, %v49
    %s52 = scalar_lea.vmem %s0, 19
    %v53 = vld [vmem:[%s52] sm:$0x1]
    %54 = vrot.lane.b32.xlu0 %v53, 110
    %v55 = vpop.permute.xlu0 %54
    %vm56 = vcmask 1015664
    %s57 = scalar_lea.vmem [#allocation0], 8
    %58 = vst.msk [vmem:[%s57] sm:$0x1] %vm56, %v55
    %s59 = scalar_lea.vmem %s0, 28
    %v60 = vld [vmem:[%s59] sm:$0x1]
    %61 = vrot.lane.b32.xlu0 %v60, 108
    %v62 = vpop.permute.xlu0 %61
    %vm63 = vcmask 999264
    %s64 = scalar_lea.vmem [#allocation0], 16
    %65 = vst.msk [vmem:[%s64] sm:$0x1] %vm63, %v62
    %s66 = scalar_lea.vmem %s0, 7
    %v67 = vld [vmem:[%s66] sm:$0x1]
    %68 = vrot.lane.b32.xlu0 %v67, 98
    %v69 = vpop.permute.xlu0 %68
    %vm70 = vcmask 917264
    %71 = vst.msk [vmem:[#allocation0] sm:$0x1] %vm70, %v69
    %s72 = scalar_lea.vmem %s0, 18
    %v73 = vld [vmem:[%s72] sm:$0x1]
    %74 = vrot.lane.b32.xlu0 %v73, 96
    %v75 = vpop.permute.xlu0 %74
    %vm76 = vcmask 900864
    %s77 = scalar_lea.vmem [#allocation0], 8
    %78 = vst.msk [vmem:[%s77] sm:$0x1] %vm76, %v75
    %s79 = scalar_lea.vmem %s0, 27
    %v80 = vld [vmem:[%s79] sm:$0x1]
    %81 = vrot.lane.b32.xlu0 %v80, 94
    %v82 = vpop.permute.xlu0 %81
    %vm83 = vcmask 884464
    %s84 = scalar_lea.vmem [#allocation0], 16
    %85 = vst.msk [vmem:[%s84] sm:$0x1] %vm83, %v82
    %s86 = scalar_lea.vmem %s0, 6
    %v87 = vld [vmem:[%s86] sm:$0x1]
    %88 = vrot.lane.b32.xlu0 %v87, 84
    %v89 = vpop.permute.xlu0 %88
    %vm90 = vcmask 802464
    %91 = vst.msk [vmem:[#allocation0] sm:$0x1] %vm90, %v89
    %s92 = scalar_lea.vmem %s0, 17
    %v93 = vld [vmem:[%s92] sm:$0x1]
    %94 = vrot.lane.b32.xlu0 %v93, 82
    %v95 = vpop.permute.xlu0 %94
    %vm96 = vcmask 786064
    %s97 = scalar_lea.vmem [#allocation0], 8
    %98 = vst.msk [vmem:[%s97] sm:$0x1] %vm96, %v95
    %s99 = scalar_lea.vmem %s0, 26
    %v100 = vld [vmem:[%s99] sm:$0x1]
    %101 = vrot.lane.b32.xlu0 %v100, 80
    %v102 = vpop.permute.xlu0 %101
    %vm103 = vcmask 769664
    %s104 = scalar_lea.vmem [#allocation0], 16
    %105 = vst.msk [vmem:[%s104] sm:$0x1] %vm103, %v102
    %s106 = scalar_lea.vmem %s0, 5
    %v107 = vld [vmem:[%s106] sm:$0x1]
    %108 = vrot.lane.b32.xlu0 %v107, 70
    %v109 = vpop.permute.xlu0 %108
    %vm110 = vcmask 687664
    %111 = vst.msk [vmem:[#allocation0] sm:$0x1] %vm110, %v109
    %s112 = scalar_lea.vmem %s0, 16
    %v113 = vld [vmem:[%s112] sm:$0x1]
    %114 = vrot.lane.b32.xlu0 %v113, 68
    %v115 = vpop.permute.xlu0 %114
    %vm116 = vcmask 671264
    %s117 = scalar_lea.vmem [#allocation0], 8
    %118 = vst.msk [vmem:[%s117] sm:$0x1] %vm116, %v115
    %s119 = scalar_lea.vmem %s0, 25
    %v120 = vld [vmem:[%s119] sm:$0x1]
    %121 = vrot.lane.b32.xlu0 %v120, 66
    %v122 = vpop.permute.xlu0 %121
    %vm123 = vcmask 654864
    %s124 = scalar_lea.vmem [#allocation0], 16
    %125 = vst.msk [vmem:[%s124] sm:$0x1] %vm123, %v122
    %s126 = scalar_lea.vmem %s0, 4
    %v127 = vld [vmem:[%s126] sm:$0x1]
    %128 = vrot.lane.b32.xlu0 %v127, 56
    %v129 = vpop.permute.xlu0 %128
    %vm130 = vcmask 572864
    %131 = vst.msk [vmem:[#allocation0] sm:$0x1] %vm130, %v129
    %s132 = scalar_lea.vmem %s0, 13
    %v133 = vld [vmem:[%s132] sm:$0x1]
    %134 = vrot.lane.b32.xlu0 %v133, 54
    %v135 = vpop.permute.xlu0 %134
    %vm136 = vcmask 556464
    %s137 = scalar_lea.vmem [#allocation0], 8
    %138 = vst.msk [vmem:[%s137] sm:$0x1] %vm136, %v135
    %s139 = scalar_lea.vmem %s0, 24
    %v140 = vld [vmem:[%s139] sm:$0x1]
    %141 = vrot.lane.b32.xlu0 %v140, 52
    %v142 = vpop.permute.xlu0 %141
    %vm143 = vcmask 540064
    %s144 = scalar_lea.vmem [#allocation0], 16
    %145 = vst.msk [vmem:[%s144] sm:$0x1] %vm143, %v142
    %s146 = scalar_lea.vmem %s0, 3
    %v147 = vld [vmem:[%s146] sm:$0x1]
    %148 = vrot.lane.b32.xlu0 %v147, 42
    %v149 = vpop.permute.xlu0 %148
    %vm150 = vcmask 458064
    %151 = vst.msk [vmem:[#allocation0] sm:$0x1] %vm150, %v149
    %s152 = scalar_lea.vmem %s0, 12
    %v153 = vld [vmem:[%s152] sm:$0x1]
    %154 = vrot.lane.b32.xlu0 %v153, 40
    %v155 = vpop.permute.xlu0 %154
    %vm156 = vcmask 441664
    %s157 = scalar_lea.vmem [#allocation0], 8
    %158 = vst.msk [vmem:[%s157] sm:$0x1] %vm156, %v155
    %s159 = scalar_lea.vmem %s0, 23
    %v160 = vld [vmem:[%s159] sm:$0x1]
    %161 = vrot.lane.b32.xlu0 %v160, 38
    %v162 = vpop.permute.xlu0 %161
    %vm163 = vcmask 425264
    %s164 = scalar_lea.vmem [#allocation0], 16
    %165 = vst.msk [vmem:[%s164] sm:$0x1] %vm163, %v162
    %s166 = scalar_lea.vmem %s0, 2
    %v167 = vld [vmem:[%s166] sm:$0x1]
    %168 = vrot.lane.b32.xlu0 %v167, 28
    %v169 = vpop.permute.xlu0 %168
    %vm170 = vcmask 343264
    %171 = vst.msk [vmem:[#allocation0] sm:$0x1] %vm170, %v169
    %s172 = scalar_lea.vmem %s0, 11
    %v173 = vld [vmem:[%s172] sm:$0x1]
    %174 = vrot.lane.b32.xlu0 %v173, 26
    %v175 = vpop.permute.xlu0 %174
    %vm176 = vcmask 326864
    %s177 = scalar_lea.vmem [#allocation0], 8
    %178 = vst.msk [vmem:[%s177] sm:$0x1] %vm176, %v175
    %s179 = scalar_lea.vmem %s0, 22
    %v180 = vld [vmem:[%s179] sm:$0x1]
    %181 = vrot.lane.b32.xlu0 %v180, 24
    %v182 = vpop.permute.xlu0 %181
    %vm183 = vcmask 310464
    %s184 = scalar_lea.vmem [#allocation0], 16
    %185 = vst.msk [vmem:[%s184] sm:$0x1] %vm183, %v182
    %s186 = scalar_lea.vmem %s0, 1
    %v187 = vld [vmem:[%s186] sm:$0x1]
    %188 = vrot.lane.b32.xlu0 %v187, 14
    %v189 = vpop.permute.xlu0 %188
    %vm190 = vcmask 228464
    %191 = vst.msk [vmem:[#allocation0] sm:$0x1] %vm190, %v189
    %s192 = scalar_lea.vmem %s0, 10
    %v193 = vld [vmem:[%s192] sm:$0x1]
    %194 = vrot.lane.b32.xlu0 %v193, 12
    %v195 = vpop.permute.xlu0 %194
    %vm196 = vcmask 212064
    %s197 = scalar_lea.vmem [#allocation0], 8
    %198 = vst.msk [vmem:[%s197] sm:$0x1] %vm196, %v195
    %s199 = scalar_lea.vmem %s0, 21
    %v200 = vld [vmem:[%s199] sm:$0x1]
    %201 = vrot.lane.b32.xlu0 %v200, 10
    %v202 = vpop.permute.xlu0 %201
    %vm203 = vcmask 195664
    %s204 = scalar_lea.vmem [#allocation0], 16
    %205 = vst.msk [vmem:[%s204] sm:$0x1] %vm203, %v202
    %s207 = sshll.u32 1, 1
    %s208 = ssub.s32 %s207, 1
    %v210 = vld [vmem:[#allocation0] sm:%s208]
    %s211 = sshll.u32 1, 1
    %s212 = ssub.s32 %s211, 1
    %213 = vst [vmem:[%s1] sm:%s212] %v210
    %s214 = scalar_lea.vmem [#allocation0], 8
    %v215 = vld [vmem:[%s214] sm:%s208]
    %s216 = sshll.u32 1, 1
    %s217 = ssub.s32 %s216, 1
    %s218 = scalar_lea.vmem %s1, 1
    %219 = vst [vmem:[%s218] sm:%s217] %v215
    %s220 = scalar_lea.vmem [#allocation0], 16
    %v221 = vld [vmem:[%s220] sm:%s208]
    %s222 = sshll.u32 1, 1
    %s223 = ssub.s32 %s222, 1
    %s224 = smul.addr 1, 2
    %s225 = scalar_lea.vmem %s1, %s224
    %226 = vst [vmem:[%s225] sm:%s223] %v221
    %s227 = scalar_lea.vmem [#allocation0], 24
    %v228 = vld [vmem:[%s227] sm:%s208]
    %s229 = sshll.u32 1, 1
    %s230 = ssub.s32 %s229, 1
    %s231 = smul.addr 1, 3
    %s232 = scalar_lea.vmem %s1, %s231
    %233 = vst [vmem:[%s232] sm:%s230] %v228

// kernel: conv2d.1
$region0: #{conv2d.1}
  #allocation0 [shape = 'u32[]', space=smem, size = 0x4, offset = 0x4, fixed_abs, tag = 'smem constant byte address 0x4 - core index']
  #allocation1 [shape = 'u32[144,128]{1,0:T(1,128)}', space=vmem, size = 0x12000, scoped, tag = 'internal scratch']
  %s0 = inlined_call_operand.vmem [shape: f32[6,27], index: 0, kind: input, shape index: {}]
  %s1 = inlined_call_operand.vmem [shape: f32[27,392], index: 1, kind: input, shape index: {}]
  %s2 = inlined_call_operand.vmem [shape: f32[6,1], index: 2, kind: input, shape index: {}]
  %s3 = inlined_call_operand.vmem [shape: f32[6,392], index: 3, kind: output, shape index: {}]
  %s4 = sld [smem:[#allocation0]]
  $region22: #{conv2d.1} parent=0
    _
  %s6 = ssub.s32 1, %s4
  %s7 = scalar_select 0, %s6, %s4
  // Predicated region
  $region2: #{conv2d.1} parent=0 // pred_check
    _
  $region3: #{conv2d.1} parent=0 // pred_check_branch
    %9 = sbr.rel (0) target = $region5
  $region4: #{conv2d.1} parent=0 // pred_region
    _
  $region5: #{conv2d.1} parent=0 // pred_fallthru
    _
  // Predicated region
  $region6: #{conv2d.1} parent=0 // pred_check
    _
  $region7: #{conv2d.1} parent=0 // pred_check_branch
    %11 = sbr.rel (0) target = $region9
  $region8: #{conv2d.1} parent=0 // pred_region
    _
  $region9: #{conv2d.1} parent=0 // pred_fallthru
    _
  // Predicated region
  $region10: #{conv2d.1} parent=0 // pred_check
    _
  $region11: #{conv2d.1} parent=0 // pred_check_branch
    %13 = sbr.rel (0) target = $region13
  $region12: #{conv2d.1} parent=0 // pred_region
    _
  $region13: #{conv2d.1} parent=0 // pred_fallthru
    _
  %v14 = vld [vmem:[%s0] sm:$0x3f]
  %v15 = vld [vmem:[%s1] sm:$0xff]
  %v16 = vld [vmem:[%s1 + $0x8] sm:$0xff]
  %v17 = vld [vmem:[%s1 + $0x10] sm:$0xff]
  %v18 = vld [vmem:[%s1 + $0x18] sm:$0xff]
  %v19 = vld [vmem:[%s1 + $0x20] sm:$0xff]
  %v20 = vld [vmem:[%s1 + $0x28] sm:$0xff]
  %v21 = vld [vmem:[%s1 + $0x30] sm:$0xff]
  %v22 = vld [vmem:[%s1 + $0x38] sm:$0xff]
  %v23 = vld [vmem:[%s1 + $0x40] sm:$0xff]
  %v24 = vld [vmem:[%s1 + $0x48] sm:$0xff]
  %v25 = vld [vmem:[%s1 + $0x50] sm:$0xff]
  %v26 = vld [vmem:[%s1 + $0x58] sm:$0xff]
  %v27 = vld [vmem:[%s1 + $0x60] sm:$0x7]
  %v28 = vld [vmem:[%s1 + $0x68] sm:$0x7]
  %v29 = vld [vmem:[%s1 + $0x70] sm:$0x7]
  %v30 = vld [vmem:[%s1 + $0x78] sm:$0x7]
  %v31 = vld [vmem:[%s2] sm:$0x3f]
  %33 = vset.pattern.permute.xlu0 0
  %34 = vperm.xlu0 %33, %v31
  %v35 = vpop.permute.xlu0 %34
  %vm37 = vcmask 220160
  %v39 = vsel %vm37, %v14, 0
  %vm41 = vcmask 1042432
  %v43 = vsel %vm41, %v27, 0
  %v46 = vsel %vm41, %v28, 0
  %v49 = vsel %vm41, %v29, 0
  %v52 = vsel %vm41, %v30, 0
  %54 = vmatprep.subr.mxu0 0.0
  %55 = vmatpush1.msra.mxu0 0.0
  %56 = vmatprep.subr.mxu0 0.0
  %57 = vmatpush1.msra.mxu0 0.0
  %58 = vmatprep.subr.mxu0 0.0
  %59 = vmatpush1.msra.mxu0 0.0
  %60 = vmatprep.subr.mxu0 0.0
  %61 = vmatpush1.msra.mxu0 0.0
  %62 = vmatprep.subr.mxu0 0.0
  %63 = vmatpush1.msra.mxu0 0.0
  %64 = vmatprep.subr.mxu0 0.0
  %65 = vmatpush1.msra.mxu0 0.0
  %66 = vmatprep.subr.mxu0 0.0
  %67 = vmatpush1.msra.mxu0 0.0
  %68 = vmatprep.subr.mxu0 0.0
  %69 = vmatpush1.msra.mxu0 0.0
  %70 = vmatprep.subr.mxu0 0.0
  %71 = vmatpush1.msra.mxu0 0.0
  %72 = vmatprep.subr.mxu0 0.0
  %73 = vmatpush1.msra.mxu0 0.0
  %74 = vmatprep.subr.mxu0 0.0
  %75 = vmatpush1.msra.mxu0 0.0
  %76 = vmatprep.subr.mxu0 0.0
  %77 = vmatpush1.msra.mxu0 0.0
  %78 = vmatprep.subr.mxu0 %v46
  %79 = vmatpush1.msra.mxu0 %v43
  %80 = vmatprep.subr.mxu0 %v24
  %81 = vmatpush1.msra.mxu0 %v23
  %82 = vmatprep.subr.mxu0 %v20
  %83 = vmatpush1.msra.mxu0 %v19
  %84 = vmatprep.subr.mxu0 %v16
  %85 = vmatpush1.msra.mxu0 %v15
  %86 = vmatprep.subr.mxu0 0.0
  %87 = vmatpush2.msra.mxu0 0.0
  %88 = vmatprep.subr.mxu0 0.0
  %89 = vmatpush2.msra.mxu0 0.0
  %90 = vmatprep.subr.mxu0 0.0
  %91 = vmatpush2.msra.mxu0 0.0
  %92 = vmatprep.subr.mxu0 0.0
  %93 = vmatpush2.msra.mxu0 0.0
  %94 = vmatprep.subr.mxu0 0.0
  %95 = vmatpush2.msra.mxu0 0.0
  %96 = vmatprep.subr.mxu0 0.0
  %97 = vmatpush2.msra.mxu0 0.0
  %98 = vmatprep.subr.mxu0 0.0
  %99 = vmatpush2.msra.mxu0 0.0
  %100 = vmatprep.subr.mxu0 0.0
  %101 = vmatpush2.msra.mxu0 0.0
  %102 = vmatprep.subr.mxu0 0.0
  %103 = vmatpush2.msra.mxu0 0.0
  %104 = vmatprep.subr.mxu0 0.0
  %105 = vmatpush2.msra.mxu0 0.0
  %106 = vmatprep.subr.mxu0 0.0
  %107 = vmatpush2.msra.mxu0 0.0
  %108 = vmatprep.subr.mxu0 0.0
  %109 = vmatpush2.msra.mxu0 0.0
  %110 = vmatprep.subr.mxu0 0.0
  %111 = vmatpush2.msra.mxu0 0.0
  %112 = vmatprep.subr.mxu0 0.0
  %113 = vmatpush2.msra.mxu0 0.0
  %114 = vmatprep.subr.mxu0 0.0
  %115 = vmatpush2.msra.mxu0 0.0
  %116 = vmatprep.subr.mxu0 0.0
  %117 = vmatpush2.msra.mxu0 0.0
  %118 = vmatprep.mubr.f32.mxu0 0.0
  %119 = vmatmul.mubr.f32.gmra.mxu0 %v39
  %v120 = vpop.f32.mrf.mxu0
  %v121 = vadd.f32 %v35, %v120
  %v122 = vpop.f32.mrf.mxu0
  %v123 = vadd.f32 %v35, %v122
  %124 = vdwg.mxu0
  %125 = vmatprep.subr.mxu0 0.0
  %126 = vmatpush1.msra.mxu0 0.0
  %127 = vmatprep.subr.mxu0 0.0
  %128 = vmatpush1.msra.mxu0 0.0
  %129 = vmatprep.subr.mxu0 0.0
  %130 = vmatpush1.msra.mxu0 0.0
  %131 = vmatprep.subr.mxu0 0.0
  %132 = vmatpush1.msra.mxu0 0.0
  %133 = vmatprep.subr.mxu0 0.0
  %134 = vmatpush1.msra.mxu0 0.0
  %135 = vmatprep.subr.mxu0 0.0
  %136 = vmatpush1.msra.mxu0 0.0
  %137 = vmatprep.subr.mxu0 0.0
  %138 = vmatpush1.msra.mxu0 0.0
  %139 = vmatprep.subr.mxu0 0.0
  %140 = vmatpush1.msra.mxu0 0.0
  %141 = vmatprep.subr.mxu0 0.0
  %142 = vmatpush1.msra.mxu0 0.0
  %143 = vmatprep.subr.mxu0 0.0
  %144 = vmatpush1.msra.mxu0 0.0
  %145 = vmatprep.subr.mxu0 0.0
  %146 = vmatpush1.msra.mxu0 0.0
  %147 = vmatprep.subr.mxu0 0.0
  %148 = vmatpush1.msra.mxu0 0.0
  %149 = vmatprep.subr.mxu0 %v52
  %150 = vmatpush1.msra.mxu0 %v49
  %151 = vmatprep.subr.mxu0 %v26
  %152 = vmatpush1.msra.mxu0 %v25
  %153 = vmatprep.subr.mxu0 %v22
  %154 = vmatpush1.msra.mxu0 %v21
  %155 = vmatprep.subr.mxu0 %v18
  %156 = vmatpush1.msra.mxu0 %v17
  %157 = vmatprep.subr.mxu0 0.0
  %158 = vmatpush2.msra.mxu0 0.0
  %159 = vmatprep.subr.mxu0 0.0
  %160 = vmatpush2.msra.mxu0 0.0
  %161 = vmatprep.subr.mxu0 0.0
  %162 = vmatpush2.msra.mxu0 0.0
  %163 = vmatprep.subr.mxu0 0.0
  %164 = vmatpush2.msra.mxu0 0.0
  %165 = vmatprep.subr.mxu0 0.0
  %166 = vmatpush2.msra.mxu0 0.0
  %167 = vmatprep.subr.mxu0 0.0
  %168 = vmatpush2.msra.mxu0 0.0
  %169 = vmatprep.subr.mxu0 0.0
  %170 = vmatpush2.msra.mxu0 0.0
  %171 = vmatprep.subr.mxu0 0.0
  %172 = vmatpush2.msra.mxu0 0.0
  %173 = vmatprep.subr.mxu0 0.0
  %174 = vmatpush2.msra.mxu0 0.0
  %175 = vmatprep.subr.mxu0 0.0
  %176 = vmatpush2.msra.mxu0 0.0
  %177 = vmatprep.subr.mxu0 0.0
  %178 = vmatpush2.msra.mxu0 0.0
  %179 = vmatprep.subr.mxu0 0.0
  %180 = vmatpush2.msra.mxu0 0.0
  %181 = vmatprep.subr.mxu0 0.0
  %182 = vmatpush2.msra.mxu0 0.0
  %183 = vmatprep.subr.mxu0 0.0
  %184 = vmatpush2.msra.mxu0 0.0
  %185 = vmatprep.subr.mxu0 0.0
  %186 = vmatpush2.msra.mxu0 0.0
  %187 = vmatprep.subr.mxu0 0.0
  %188 = vmatpush2.msra.mxu0 0.0
  %189 = vmatprep.mubr.f32.mxu0 0.0
  %190 = vmatmul.mubr.f32.gmra.mxu0 %v39
  %v191 = vpop.f32.mrf.mxu0
  %v192 = vadd.f32 %v35, %v191
  %v193 = vpop.f32.mrf.mxu0
  %v194 = vadd.f32 %v35, %v193
  %195 = vdwg.mxu0
  %196 = vst [vmem:[%s3] sm:$0x3f] %v121
  %197 = vst [vmem:[%s3 + $0x8] sm:$0x3f] %v123
  %198 = vst [vmem:[%s3 + $0x10] sm:$0x3f] %v192
  %vm199 = vcmask 62464
  %200 = vst.msk [vmem:[%s3 + $0x18] sm:$0x3f] %vm199, %v194
  // Predicated region
  $region14: #{conv2d.1} parent=0 // pred_check
    _
  $region15: #{conv2d.1} parent=0 // pred_check_branch
    %202 = sbr.rel (0) target = $region17
  $region16: #{conv2d.1} parent=0 // pred_region
    _
  $region17: #{conv2d.1} parent=0 // pred_fallthru
    _
  // Predicated region
  $region18: #{conv2d.1} parent=0 // pred_check
    _
  $region19: #{conv2d.1} parent=0 // pred_check_branch
    %204 = sbr.rel (0) target = $region21
  $region20: #{conv2d.1} parent=0 // pred_region
    _
  $region21: #{conv2d.1} parent=0 // pred_fallthru
    _

</llo_original>
